<compile_context>
chip_gen: v7x
topology: tpu7x:2x2x1
jax: 0.10.0
libtpu: 0.0.40
codegen_flags: <defaults>
</compile_context>

<pallas_src>
import jax
import jax.numpy as jnp
from jax.experimental import pallas as pl
from jax.experimental.pallas import tpu as pltpu

HIDDEN_SIZE = 128
VOCAB_SIZE = 15
VOCAB_PAD = 128          # lane-dense padded vocab width
NEG_BIG = -1e30          # finite "minus infinity" for padded logit columns


def policy_kernel(tok_ref, ew1_ref, b1_ref, w2_ref, b2_ref, out_ref):
    # tok_ref : [TN, 1]   int32
    # ew1_ref : [128,128] bf16   (rows >= VOCAB_SIZE are zero)
    # b1_ref  : [1, 128]  f32
    # w2_ref  : [128,128] bf16   (cols >= VOCAB_SIZE are zero)
    # b2_ref  : [1, 128]  f32    (cols >= VOCAB_SIZE are NEG_BIG)
    # out_ref : [TN, 128] f32
    tok = tok_ref[...]                                        # [TN, 1]
    tn = tok.shape[0]

    # Embedding gather + fc1, folded: one-hot over the padded vocab.
    # (Out-of-range ids produce an all-zero row; nn.Embedding would raise.)
    ids = jax.lax.broadcasted_iota(jnp.int32, (tn, VOCAB_PAD), 1)
    onehot = (tok == ids).astype(jnp.bfloat16)                # [TN, 128]

    h = jnp.dot(onehot, ew1_ref[...],
                preferred_element_type=jnp.float32) + b1_ref[...]
    h = jnp.maximum(h, 0.0)                                   # [TN, 128] f32

    logits = jnp.dot(h.astype(jnp.bfloat16), w2_ref[...],
                     preferred_element_type=jnp.float32) + b2_ref[...]

    # Numerically stable log_softmax; padded columns hold -1e30 -> exp == 0,
    # so normalization runs over the 15 real columns only.
    m = jnp.max(logits, axis=-1, keepdims=True)
    z = logits - m
    lse = jnp.log(jnp.sum(jnp.exp(z), axis=-1, keepdims=True))
    out_ref[...] = z - lse


def _round_up(x, m):
    return (x + m - 1) // m * m


def prepare_params(params):
    """One-time (per parameter update) precompute of the kernel-side layout."""
    emb, w1_t, b1, w2_t, b2 = params
    V, H = emb.shape
    ew1 = jnp.dot(emb, w1_t)                                            # [V, H]
    ew1_p = jnp.zeros((VOCAB_PAD, H), jnp.float32).at[:V].set(ew1)      # pad rows
    w2_p = jnp.zeros((H, VOCAB_PAD), jnp.float32).at[:, :V].set(w2_t)   # pad cols
    b2_p = jnp.full((1, VOCAB_PAD), NEG_BIG, jnp.float32).at[0, :V].set(b2)
    return (ew1_p.astype(jnp.bfloat16),
            b1.reshape(1, H).astype(jnp.float32),
            w2_p.astype(jnp.bfloat16),
            b2_p)


@jax.jit
def policy_network_forward(tokens, prepared):
    """tokens: int32 [B, S]; returns f32 [B, S, VOCAB_SIZE] log-probs."""
    ew1_p, b1_2d, w2_p, b2_p = prepared
    B, S = tokens.shape
    N = B * S

    # Row tile: at least 128 (full MXU M), up to 512 for larger batches.
    tile_n = min(512, _round_up(max(N, 1), 128))
    n_pad = _round_up(N, tile_n)

    tok2d = jnp.zeros((n_pad, 1), jnp.int32).at[:N, 0].set(
        tokens.reshape(N).astype(jnp.int32))

    out = pl.pallas_call(
        policy_kernel,
        out_shape=jax.ShapeDtypeStruct((n_pad, VOCAB_PAD), jnp.float32),
        grid_spec=pltpu.PrefetchScalarGridSpec(
            num_scalar_prefetch=0,
            grid=(n_pad // tile_n,),
            in_specs=[
                pl.BlockSpec((tile_n, 1), lambda i: (i, 0)),               # tokens (row-tiled)
                pl.BlockSpec((VOCAB_PAD, HIDDEN_SIZE), lambda i: (0, 0)),  # EW1 (resident)
                pl.BlockSpec((1, HIDDEN_SIZE), lambda i: (0, 0)),          # b1
                pl.BlockSpec((HIDDEN_SIZE, VOCAB_PAD), lambda i: (0, 0)),  # w2 (padded)
                pl.BlockSpec((1, VOCAB_PAD), lambda i: (0, 0)),            # b2 (padded)
            ],
            out_specs=pl.BlockSpec((tile_n, VOCAB_PAD), lambda i: (i, 0)),
        ),
        compiler_params=pltpu.CompilerParams(
            dimension_semantics=("parallel",)),
    )(tok2d, ew1_p, b1_2d, w2_p, b2_p)

    return out[:N, :VOCAB_SIZE].reshape(B, S, VOCAB_SIZE)


def init_params(key, vocab_size=VOCAB_SIZE, hidden_size=HIDDEN_SIZE):
    k_emb, k_w1, k_b1, k_w2, k_b2 = jax.random.split(key, 5)
    # nn.Embedding: N(0, 1); nn.Linear: uniform(-1/sqrt(fan_in), 1/sqrt(fan_in))
    emb = jax.random.normal(k_emb, (vocab_size, hidden_size), jnp.float32)
    bound1 = 1.0 / jnp.sqrt(hidden_size)
    w1 = jax.random.uniform(k_w1, (hidden_size, hidden_size), jnp.float32,
                            -bound1, bound1)
    b1 = jax.random.uniform(k_b1, (hidden_size,), jnp.float32, -bound1, bound1)
    w2 = jax.random.uniform(k_w2, (vocab_size, hidden_size), jnp.float32,
                            -bound1, bound1)
    b2 = jax.random.uniform(k_b2, (vocab_size,), jnp.float32, -bound1, bound1)
    # store linear weights transposed ([in, out]) so the math is x @ W
    return emb, w1.T, b1, w2.T, b2


if __name__ == "__main__":
    key = jax.random.PRNGKey(0)
    k_params, k_tok = jax.random.split(key)

    params = init_params(k_params)
    prepared = prepare_params(params)

    B, S = 2, 8
    tokens = jax.random.randint(k_tok, (B, S), 0, VOCAB_SIZE, dtype=jnp.int32)

    logp = policy_network_forward(tokens, prepared)
    jax.block_until_ready(logp)

    assert logp.shape == (B, S, VOCAB_SIZE)
    assert logp.dtype == jnp.float32

    # Reference in plain f32 JAX (kernel uses bf16 MXU operands -> loose atol).
    emb, w1_t, b1, w2_t, b2 = params
    x_ref = emb[tokens]
    h_ref = jnp.maximum(x_ref @ w1_t + b1, 0.0)
    logits_ref = h_ref @ w2_t + b2
    ref = jax.nn.log_softmax(logits_ref, axis=-1)
    assert jnp.allclose(logp, ref, atol=3e-2), "mismatch vs f32 reference"

    # Probabilities over the real vocab must still normalize to 1.
    assert jnp.allclose(jnp.sum(jnp.exp(logp), axis=-1), 1.0, atol=1e-3), \
        "log_softmax not normalized"

    print("KERNEL_OK")
</pallas_src>

<mosaic_0001>
module attributes {stable_mosaic.version = 11 : i64} {
  func.func @policy_kernel(%arg0: i32, %arg1: memref<128x1xi32, #tpu.memory_space<vmem>>, %arg2: memref<128x128xbf16, #tpu.memory_space<vmem>>, %arg3: memref<1x128xf32, #tpu.memory_space<vmem>>, %arg4: memref<128x128xbf16, #tpu.memory_space<vmem>>, %arg5: memref<1x128xf32, #tpu.memory_space<vmem>>, %arg6: memref<128x128xf32, #tpu.memory_space<vmem>>) attributes {dimension_semantics = [#tpu.dimension_semantics<parallel>], iteration_bounds = array<i64: 1>, scalar_prefetch = 0 : i64, scratch_operands = 0 : i64, tpu.core_type = #tpu.core_type<tc>, window_params = [{transform_indices = @transform_0, window_bounds = array<i64: 128, 1>}, {pipeline_mode = #tpu.pipeline_mode<synchronous>, transform_indices = @transform_1, window_bounds = array<i64: 128, 128>}, {pipeline_mode = #tpu.pipeline_mode<synchronous>, transform_indices = @transform_2, window_bounds = array<i64: 1, 128>}, {pipeline_mode = #tpu.pipeline_mode<synchronous>, transform_indices = @transform_3, window_bounds = array<i64: 128, 128>}, {pipeline_mode = #tpu.pipeline_mode<synchronous>, transform_indices = @transform_4, window_bounds = array<i64: 1, 128>}, {transform_indices = @transform_5, window_bounds = array<i64: 128, 128>}]} {
    %c0 = arith.constant 0 : index
    %c0_0 = arith.constant 0 : index
    %0 = vector.load %arg1[%c0, %c0_0] : memref<128x1xi32, #tpu.memory_space<vmem>>, vector<128x1xi32>
    %1 = tpu.iota {dimensions = array<i32: 1>} : vector<128x128xi32>
    %2 = vector.broadcast %0 : vector<128x1xi32> to vector<128x128xi32>
    %3 = arith.cmpi eq, %2, %1 : vector<128x128xi32>
    %4 = arith.extui %3 : vector<128x128xi1> to vector<128x128xi32>
    %5 = arith.sitofp %4 : vector<128x128xi32> to vector<128x128xf32>
    %6 = arith.truncf %5 : vector<128x128xf32> to vector<128x128xbf16>
    %c0_1 = arith.constant 0 : index
    %c0_2 = arith.constant 0 : index
    %7 = vector.load %arg2[%c0_1, %c0_2] : memref<128x128xbf16, #tpu.memory_space<vmem>>, vector<128x128xbf16>
    %cst = arith.constant dense<0.000000e+00> : vector<128x128xf32>
    %8 = tpu.matmul %6, %7, %cst {dimension_numbers = #tpu.dot_dimension_numbers<[1], [0], [0], [1], [0, 0, 1, 1], [], []>} : vector<128x128xbf16>, vector<128x128xbf16>, vector<128x128xf32> -> vector<128x128xf32>
    %c0_3 = arith.constant 0 : index
    %c0_4 = arith.constant 0 : index
    %9 = vector.load %arg3[%c0_3, %c0_4] : memref<1x128xf32, #tpu.memory_space<vmem>>, vector<1x128xf32>
    %10 = vector.broadcast %9 : vector<1x128xf32> to vector<128x128xf32>
    %11 = arith.addf %8, %10 : vector<128x128xf32>
    %cst_5 = arith.constant 0.000000e+00 : f32
    %12 = vector.broadcast %cst_5 : f32 to vector<128x128xf32>
    %13 = arith.maximumf %11, %12 : vector<128x128xf32>
    %14 = arith.truncf %13 : vector<128x128xf32> to vector<128x128xbf16>
    %c0_6 = arith.constant 0 : index
    %c0_7 = arith.constant 0 : index
    %15 = vector.load %arg4[%c0_6, %c0_7] : memref<128x128xbf16, #tpu.memory_space<vmem>>, vector<128x128xbf16>
    %cst_8 = arith.constant dense<0.000000e+00> : vector<128x128xf32>
    %16 = tpu.matmul %14, %15, %cst_8 {dimension_numbers = #tpu.dot_dimension_numbers<[1], [0], [0], [1], [0, 0, 1, 1], [], []>} : vector<128x128xbf16>, vector<128x128xbf16>, vector<128x128xf32> -> vector<128x128xf32>
    %c0_9 = arith.constant 0 : index
    %c0_10 = arith.constant 0 : index
    %17 = vector.load %arg5[%c0_9, %c0_10] : memref<1x128xf32, #tpu.memory_space<vmem>>, vector<1x128xf32>
    %18 = vector.broadcast %17 : vector<1x128xf32> to vector<128x128xf32>
    %19 = arith.addf %16, %18 : vector<128x128xf32>
    %cst_11 = arith.constant dense<0xFF800000> : vector<128xf32>
    %20 = vector.multi_reduction <maximumf>, %19, %cst_11 [1] : vector<128x128xf32> to vector<128xf32>
    %21 = vector.shape_cast %20 : vector<128xf32> to vector<128x1xf32>
    %22 = vector.broadcast %21 : vector<128x1xf32> to vector<128x128xf32>
    %23 = arith.subf %19, %22 : vector<128x128xf32>
    %24 = math.exp %23 : vector<128x128xf32>
    %cst_12 = arith.constant dense<0.000000e+00> : vector<128xf32>
    %25 = vector.multi_reduction <add>, %24, %cst_12 [1] : vector<128x128xf32> to vector<128xf32>
    %26 = vector.shape_cast %25 : vector<128xf32> to vector<128x1xf32>
    %27 = math.log %26 : vector<128x1xf32>
    %28 = vector.broadcast %27 : vector<128x1xf32> to vector<128x128xf32>
    %29 = arith.subf %23, %28 : vector<128x128xf32>
    %c0_13 = arith.constant 0 : index
    %c0_14 = arith.constant 0 : index
    %30 = vector.load %arg6[%c0_13, %c0_14] : memref<128x128xf32, #tpu.memory_space<vmem>>, vector<128x128xf32>
    tpu.vector_store %arg6[%c0_13, %c0_14], %29 {strides = array<i32>} : memref<128x128xf32, #tpu.memory_space<vmem>>, vector<128x128xf32>,
    return
  }
  func.func @transform_0(%arg0: i32) -> (i32, i32) {
    %c0_i32 = arith.constant 0 : i32
    %c0_i32_0 = arith.constant 0 : i32
    return %arg0, %c0_i32 : i32, i32
  }
  func.func @transform_1(%arg0: i32) -> (i32, i32) {
    %c0_i32 = arith.constant 0 : i32
    %c0_i32_0 = arith.constant 0 : i32
    %c0_i32_1 = arith.constant 0 : i32
    return %c0_i32, %c0_i32_0 : i32, i32
  }
  func.func @transform_2(%arg0: i32) -> (i32, i32) {
    %c0_i32 = arith.constant 0 : i32
    %c0_i32_0 = arith.constant 0 : i32
    %c0_i32_1 = arith.constant 0 : i32
    return %c0_i32, %c0_i32_0 : i32, i32
  }
  func.func @transform_3(%arg0: i32) -> (i32, i32) {
    %c0_i32 = arith.constant 0 : i32
    %c0_i32_0 = arith.constant 0 : i32
    %c0_i32_1 = arith.constant 0 : i32
    return %c0_i32, %c0_i32_0 : i32, i32
  }
  func.func @transform_4(%arg0: i32) -> (i32, i32) {
    %c0_i32 = arith.constant 0 : i32
    %c0_i32_0 = arith.constant 0 : i32
    %c0_i32_1 = arith.constant 0 : i32
    return %c0_i32, %c0_i32_0 : i32, i32
  }
  func.func @transform_5(%arg0: i32) -> (i32, i32) {
    %c0_i32 = arith.constant 0 : i32
    %c0_i32_0 = arith.constant 0 : i32
    return %arg0, %c0_i32 : i32, i32
  }
}

</mosaic_0001>

<llo_original>
// kernel: policy_network_forward.1
$region0: #{policy_network_forward.1}
  #allocation0 [shape = 'u32[]', space=smem, size = 0x4, offset = 0x4, fixed_abs, tag = 'smem constant byte address 0x4 - core index']
  #allocation1 [shape = 'u32[144,128]{1,0:T(1,128)}', space=vmem, size = 0x12000, scoped, tag = 'internal scratch']
  %s0 = inlined_call_operand.vmem [shape: s32[128,1], index: 0, kind: input, shape index: {}]
  %s1 = inlined_call_operand.vmem [shape: bf16[128,128], index: 1, kind: input, shape index: {}]
  %s2 = inlined_call_operand.vmem [shape: f32[1,128], index: 2, kind: input, shape index: {}]
  %s3 = inlined_call_operand.vmem [shape: bf16[128,128], index: 3, kind: input, shape index: {}]
  %s4 = inlined_call_operand.vmem [shape: f32[1,128], index: 4, kind: input, shape index: {}]
  %s5 = inlined_call_operand.vmem [shape: f32[128,128], index: 5, kind: output, shape index: {}]
  %s6 = sld [smem:[#allocation0]]
  $region30: #{policy_network_forward.1} parent=0
    _
  %s8 = ssub.s32 1, %s6
  %s9 = scalar_select 0, %s8, %s6
  // Predicated region
  $region2: #{policy_network_forward.1} parent=0 // pred_check
    _
  $region3: #{policy_network_forward.1} parent=0 // pred_check_branch
    %11 = sbr.rel (0) target = $region5
  $region4: #{policy_network_forward.1} parent=0 // pred_region
    _
  $region5: #{policy_network_forward.1} parent=0 // pred_fallthru
    _
  // Predicated region
  $region6: #{policy_network_forward.1} parent=0 // pred_check
    _
  $region7: #{policy_network_forward.1} parent=0 // pred_check_branch
    %13 = sbr.rel (0) target = $region9
  $region8: #{policy_network_forward.1} parent=0 // pred_region
    _
  $region9: #{policy_network_forward.1} parent=0 // pred_fallthru
    _
  // Predicated region
  $region10: #{policy_network_forward.1} parent=0 // pred_check
    _
  $region11: #{policy_network_forward.1} parent=0 // pred_check_branch
    %15 = sbr.rel (0) target = $region13
  $region12: #{policy_network_forward.1} parent=0 // pred_region
    _
  $region13: #{policy_network_forward.1} parent=0 // pred_fallthru
    _
  // Predicated region
  $region14: #{policy_network_forward.1} parent=0 // pred_check
    _
  $region15: #{policy_network_forward.1} parent=0 // pred_check_branch
    %17 = sbr.rel (0) target = $region17
  $region16: #{policy_network_forward.1} parent=0 // pred_region
    _
  $region17: #{policy_network_forward.1} parent=0 // pred_fallthru
    _
  // Predicated region
  $region18: #{policy_network_forward.1} parent=0 // pred_check
    _
  $region19: #{policy_network_forward.1} parent=0 // pred_check_branch
    %19 = sbr.rel (0) target = $region21
  $region20: #{policy_network_forward.1} parent=0 // pred_region
    _
  $region21: #{policy_network_forward.1} parent=0 // pred_fallthru
    _
  %v21 = vld [vmem:[%s0] sm:$0xff]
  %v22 = vld [vmem:[%s0 + $0x8] sm:$0xff]
  %v23 = vld [vmem:[%s0 + $0x10] sm:$0xff]
  %v24 = vld [vmem:[%s0 + $0x18] sm:$0xff]
  %v25 = vld [vmem:[%s0 + $0x20] sm:$0xff]
  %v26 = vld [vmem:[%s0 + $0x28] sm:$0xff]
  %v27 = vld [vmem:[%s0 + $0x30] sm:$0xff]
  %v28 = vld [vmem:[%s0 + $0x38] sm:$0xff]
  %v29 = vld [vmem:[%s0 + $0x40] sm:$0xff]
  %v30 = vld [vmem:[%s0 + $0x48] sm:$0xff]
  %v31 = vld [vmem:[%s0 + $0x50] sm:$0xff]
  %v32 = vld [vmem:[%s0 + $0x58] sm:$0xff]
  %v33 = vld [vmem:[%s0 + $0x60] sm:$0xff]
  %v34 = vld [vmem:[%s0 + $0x68] sm:$0xff]
  %v35 = vld [vmem:[%s0 + $0x70] sm:$0xff]
  %v36 = vld [vmem:[%s0 + $0x78] sm:$0xff]
  %v37 = vlaneseq
  %v38 = vand.u32 %v37, 127
  %39 = vset.pattern.permute.xlu0 0
  %40 = vperm.xlu0 %39, %v21
  %v41 = vpop.permute.xlu0 %40
  %42 = vset.pattern.permute.xlu0 0
  %43 = vperm.xlu0 %42, %v22
  %v44 = vpop.permute.xlu0 %43
  %45 = vset.pattern.permute.xlu0 0
  %46 = vperm.xlu0 %45, %v23
  %v47 = vpop.permute.xlu0 %46
  %48 = vset.pattern.permute.xlu0 0
  %49 = vperm.xlu0 %48, %v24
  %v50 = vpop.permute.xlu0 %49
  %51 = vset.pattern.permute.xlu0 0
  %52 = vperm.xlu0 %51, %v25
  %v53 = vpop.permute.xlu0 %52
  %54 = vset.pattern.permute.xlu0 0
  %55 = vperm.xlu0 %54, %v26
  %v56 = vpop.permute.xlu0 %55
  %57 = vset.pattern.permute.xlu0 0
  %58 = vperm.xlu0 %57, %v27
  %v59 = vpop.permute.xlu0 %58
  %60 = vset.pattern.permute.xlu0 0
  %61 = vperm.xlu0 %60, %v28
  %v62 = vpop.permute.xlu0 %61
  %63 = vset.pattern.permute.xlu0 0
  %64 = vperm.xlu0 %63, %v29
  %v65 = vpop.permute.xlu0 %64
  %66 = vset.pattern.permute.xlu0 0
  %67 = vperm.xlu0 %66, %v30
  %v68 = vpop.permute.xlu0 %67
  %69 = vset.pattern.permute.xlu0 0
  %70 = vperm.xlu0 %69, %v31
  %v71 = vpop.permute.xlu0 %70
  %72 = vset.pattern.permute.xlu0 0
  %73 = vperm.xlu0 %72, %v32
  %v74 = vpop.permute.xlu0 %73
  %75 = vset.pattern.permute.xlu0 0
  %76 = vperm.xlu0 %75, %v33
  %v77 = vpop.permute.xlu0 %76
  %78 = vset.pattern.permute.xlu0 0
  %79 = vperm.xlu0 %78, %v34
  %v80 = vpop.permute.xlu0 %79
  %81 = vset.pattern.permute.xlu0 0
  %82 = vperm.xlu0 %81, %v35
  %v83 = vpop.permute.xlu0 %82
  %84 = vset.pattern.permute.xlu0 0
  %85 = vperm.xlu0 %84, %v36
  %v86 = vpop.permute.xlu0 %85
  %vm87 = vcmp.eq.s32.totalorder %v41, %v38
  %vm88 = vcmp.eq.s32.totalorder %v44, %v38
  %vm89 = vcmp.eq.s32.totalorder %v47, %v38
  %vm90 = vcmp.eq.s32.totalorder %v50, %v38
  %vm91 = vcmp.eq.s32.totalorder %v53, %v38
  %vm92 = vcmp.eq.s32.totalorder %v56, %v38
  %vm93 = vcmp.eq.s32.totalorder %v59, %v38
  %vm94 = vcmp.eq.s32.totalorder %v62, %v38
  %vm95 = vcmp.eq.s32.totalorder %v65, %v38
  %vm96 = vcmp.eq.s32.totalorder %v68, %v38
  %vm97 = vcmp.eq.s32.totalorder %v71, %v38
  %vm98 = vcmp.eq.s32.totalorder %v74, %v38
  %vm99 = vcmp.eq.s32.totalorder %v77, %v38
  %vm100 = vcmp.eq.s32.totalorder %v80, %v38
  %vm101 = vcmp.eq.s32.totalorder %v83, %v38
  %vm102 = vcmp.eq.s32.totalorder %v86, %v38
  %v103 = vsel %vm87, 1, 0
  %v104 = vsel %vm88, 1, 0
  %v105 = vsel %vm89, 1, 0
  %v106 = vsel %vm90, 1, 0
  %v107 = vsel %vm91, 1, 0
  %v108 = vsel %vm92, 1, 0
  %v109 = vsel %vm93, 1, 0
  %v110 = vsel %vm94, 1, 0
  %v111 = vsel %vm95, 1, 0
  %v112 = vsel %vm96, 1, 0
  %v113 = vsel %vm97, 1, 0
  %v114 = vsel %vm98, 1, 0
  %v115 = vsel %vm99, 1, 0
  %v116 = vsel %vm100, 1, 0
  %v117 = vsel %vm101, 1, 0
  %v118 = vsel %vm102, 1, 0
  %v119 = vcvt.s32.f32 %v103
  %v120 = vcvt.s32.f32 %v104
  %v121 = vcvt.s32.f32 %v105
  %v122 = vcvt.s32.f32 %v106
  %v123 = vcvt.s32.f32 %v107
  %v124 = vcvt.s32.f32 %v108
  %v125 = vcvt.s32.f32 %v109
  %v126 = vcvt.s32.f32 %v110
  %v127 = vcvt.s32.f32 %v111
  %v128 = vcvt.s32.f32 %v112
  %v129 = vcvt.s32.f32 %v113
  %v130 = vcvt.s32.f32 %v114
  %v131 = vcvt.s32.f32 %v115
  %v132 = vcvt.s32.f32 %v116
  %v133 = vcvt.s32.f32 %v117
  %v134 = vcvt.s32.f32 %v118
  %v135 = vpack.c.bf16 %v120, %v119
  %v136 = vpack.c.bf16 %v122, %v121
  %v137 = vpack.c.bf16 %v124, %v123
  %v138 = vpack.c.bf16 %v126, %v125
  %v139 = vpack.c.bf16 %v128, %v127
  %v140 = vpack.c.bf16 %v130, %v129
  %v141 = vpack.c.bf16 %v132, %v131
  %v142 = vpack.c.bf16 %v134, %v133
  %v143 = vld [vmem:[%s1] sm:$0xf]
  %v144 = vld [vmem:[%s1 + $0x4] sm:$0xf]
  %v145 = vld [vmem:[%s1 + $0x8] sm:$0xf]
  %v146 = vld [vmem:[%s1 + $0xc] sm:$0xf]
  %v147 = vld [vmem:[%s1 + $0x10] sm:$0xf]
  %v148 = vld [vmem:[%s1 + $0x14] sm:$0xf]
  %v149 = vld [vmem:[%s1 + $0x18] sm:$0xf]
  %v150 = vld [vmem:[%s1 + $0x1c] sm:$0xf]
  %v151 = vld [vmem:[%s1 + $0x20] sm:$0xf]
  %v152 = vld [vmem:[%s1 + $0x24] sm:$0xf]
  %v153 = vld [vmem:[%s1 + $0x28] sm:$0xf]
  %v154 = vld [vmem:[%s1 + $0x2c] sm:$0xf]
  %v155 = vld [vmem:[%s1 + $0x30] sm:$0xf]
  %v156 = vld [vmem:[%s1 + $0x34] sm:$0xf]
  %v157 = vld [vmem:[%s1 + $0x38] sm:$0xf]
  %v158 = vld [vmem:[%s1 + $0x3c] sm:$0xf]
  %v159 = vld [vmem:[%s2] sm:$0x1]
  %v161 = vlaneseq
  %v162 = vshrl.u32 %v161, 7
  %v163 = vsub.s32 0, %v162
  %v164 = vrot.slane %v159, %v163
  %v182 = vunpack.c.l.b16 %v143
  %v183 = vunpack.c.l.b16 %v144
  %v184 = vunpack.c.l.b16 %v145
  %v185 = vunpack.c.l.b16 %v146
  %v186 = vunpack.c.l.b16 %v147
  %v187 = vunpack.c.l.b16 %v148
  %v188 = vunpack.c.l.b16 %v149
  %v189 = vunpack.c.l.b16 %v150
  %v190 = vunpack.c.l.b16 %v151
  %v191 = vunpack.c.l.b16 %v152
  %v192 = vunpack.c.l.b16 %v153
  %v193 = vunpack.c.l.b16 %v154
  %v194 = vunpack.c.l.b16 %v155
  %v195 = vunpack.c.l.b16 %v156
  %v196 = vunpack.c.l.b16 %v157
  %v197 = vunpack.c.l.b16 %v158
  %v198 = vpack.c.b16 %v183, %v182
  %v199 = vpack.c.b16 %v185, %v184
  %v200 = vpack.c.b16 %v187, %v186
  %v201 = vpack.c.b16 %v189, %v188
  %v202 = vpack.c.b16 %v191, %v190
  %v203 = vpack.c.b16 %v193, %v192
  %v204 = vpack.c.b16 %v195, %v194
  %v205 = vpack.c.b16 %v197, %v196
  %214 = vmatprep.subr.bf16.mxu0 0
  %215 = vmatpush1.bf16.msra.mxu0 %v198
  %216 = vmatprep.subr.bf16.mxu0 0
  %217 = vmatpush1.bf16.msra.mxu0 %v199
  %218 = vmatprep.subr.bf16.mxu0 0
  %219 = vmatpush1.bf16.msra.mxu0 %v200
  %220 = vmatprep.subr.bf16.mxu0 0
  %221 = vmatpush1.bf16.msra.mxu0 %v201
  %222 = vmatprep.subr.bf16.mxu0 0
  %223 = vmatpush1.bf16.msra.mxu0 %v202
  %224 = vmatprep.subr.bf16.mxu0 0
  %225 = vmatpush1.bf16.msra.mxu0 %v203
  %226 = vmatprep.subr.bf16.mxu0 0
  %227 = vmatpush1.bf16.msra.mxu0 %v204
  %228 = vmatprep.subr.bf16.mxu0 0
  %229 = vmatpush1.bf16.msra.mxu0 %v205
  %230 = vmatprep.subr.bf16.mxu0 0
  %231 = vmatpush1.bf16.msra.mxu0 0
  %232 = vmatprep.subr.bf16.mxu0 0
  %233 = vmatpush1.bf16.msra.mxu0 0
  %234 = vmatprep.subr.bf16.mxu0 0
  %235 = vmatpush1.bf16.msra.mxu0 0
  %236 = vmatprep.subr.bf16.mxu0 0
  %237 = vmatpush1.bf16.msra.mxu0 0
  %238 = vmatprep.subr.bf16.mxu0 0
  %239 = vmatpush1.bf16.msra.mxu0 0
  %240 = vmatprep.subr.bf16.mxu0 0
  %241 = vmatpush1.bf16.msra.mxu0 0
  %242 = vmatprep.subr.bf16.mxu0 0
  %243 = vmatpush1.bf16.msra.mxu0 0
  %244 = vmatprep.subr.bf16.mxu0 0
  %245 = vmatpush1.bf16.msra.mxu0 0
  %246 = vmatprep.mubr.bf16.mxu0 0
  %247 = vmatmul.mubr.bf16.gmra.mrb[0].mxu0 %v135
  %v248 = vpop.f32.mrb[0].mxu0
  %v249 = vadd.f32 %v164, %v248
  %v250 = vpop.f32.mrb[0].mxu0
  %v251 = vpop.f32.mrb[0].mxu0
  %v252 = vadd.f32 %v164, %v251
  %v253 = vpop.f32.mrb[0].mxu0
  %254 = vmatprep.mubr.bf16.mxu0 0
  %255 = vmatmul.mubr.bf16.gmra.mrb[0].mxu0 %v136
  %v256 = vpop.f32.mrb[0].mxu0
  %v257 = vadd.f32 %v164, %v256
  %v258 = vpop.f32.mrb[0].mxu0
  %v259 = vpop.f32.mrb[0].mxu0
  %v260 = vadd.f32 %v164, %v259
  %v261 = vpop.f32.mrb[0].mxu0
  %262 = vmatprep.mubr.bf16.mxu0 0
  %263 = vmatmul.mubr.bf16.gmra.mrb[0].mxu0 %v137
  %v264 = vpop.f32.mrb[0].mxu0
  %v265 = vadd.f32 %v164, %v264
  %v266 = vpop.f32.mrb[0].mxu0
  %v267 = vpop.f32.mrb[0].mxu0
  %v268 = vadd.f32 %v164, %v267
  %v269 = vpop.f32.mrb[0].mxu0
  %270 = vmatprep.mubr.bf16.mxu0 0
  %271 = vmatmul.mubr.bf16.gmra.mrb[0].mxu0 %v138
  %v272 = vpop.f32.mrb[0].mxu0
  %v273 = vadd.f32 %v164, %v272
  %v274 = vpop.f32.mrb[0].mxu0
  %v275 = vpop.f32.mrb[0].mxu0
  %v276 = vadd.f32 %v164, %v275
  %v277 = vpop.f32.mrb[0].mxu0
  %278 = vmatprep.mubr.bf16.mxu0 0
  %279 = vmatmul.mubr.bf16.gmra.mrb[0].mxu0 %v139
  %v280 = vpop.f32.mrb[0].mxu0
  %v281 = vadd.f32 %v164, %v280
  %v282 = vpop.f32.mrb[0].mxu0
  %v283 = vpop.f32.mrb[0].mxu0
  %v284 = vadd.f32 %v164, %v283
  %v285 = vpop.f32.mrb[0].mxu0
  %286 = vmatprep.mubr.bf16.mxu0 0
  %287 = vmatmul.mubr.bf16.gmra.mrb[0].mxu0 %v140
  %v288 = vpop.f32.mrb[0].mxu0
  %v289 = vadd.f32 %v164, %v288
  %v290 = vpop.f32.mrb[0].mxu0
  %v291 = vpop.f32.mrb[0].mxu0
  %v292 = vadd.f32 %v164, %v291
  %v293 = vpop.f32.mrb[0].mxu0
  %294 = vmatprep.mubr.bf16.mxu0 0
  %295 = vmatmul.mubr.bf16.gmra.mrb[0].mxu0 %v141
  %v296 = vpop.f32.mrb[0].mxu0
  %v297 = vadd.f32 %v164, %v296
  %v298 = vpop.f32.mrb[0].mxu0
  %v299 = vpop.f32.mrb[0].mxu0
  %v300 = vadd.f32 %v164, %v299
  %v301 = vpop.f32.mrb[0].mxu0
  %302 = vmatprep.mubr.bf16.mxu0 0
  %303 = vmatmul.mubr.bf16.gmra.mrb[0].mxu0 %v142
  %v304 = vpop.f32.mrb[0].mxu0
  %v305 = vadd.f32 %v164, %v304
  %v306 = vpop.f32.mrb[0].mxu0
  %v307 = vpop.f32.mrb[0].mxu0
  %v308 = vadd.f32 %v164, %v307
  %v309 = vpop.f32.mrb[0].mxu0
  %310 = vdwg.mxu0
  %v311 = vmax.f32 %v249, 0.0
  %v312 = vmax.f32 %v252, 0.0
  %v313 = vmax.f32 %v257, 0.0
  %v314 = vmax.f32 %v260, 0.0
  %v315 = vmax.f32 %v265, 0.0
  %v316 = vmax.f32 %v268, 0.0
  %v317 = vmax.f32 %v273, 0.0
  %v318 = vmax.f32 %v276, 0.0
  %v319 = vmax.f32 %v281, 0.0
  %v320 = vmax.f32 %v284, 0.0
  %v321 = vmax.f32 %v289, 0.0
  %v322 = vmax.f32 %v292, 0.0
  %v323 = vmax.f32 %v297, 0.0
  %v324 = vmax.f32 %v300, 0.0
  %v325 = vmax.f32 %v305, 0.0
  %v326 = vmax.f32 %v308, 0.0
  %v327 = vpack.c.bf16 %v312, %v311
  %v328 = vpack.c.bf16 %v314, %v313
  %v329 = vpack.c.bf16 %v316, %v315
  %v330 = vpack.c.bf16 %v318, %v317
  %v331 = vpack.c.bf16 %v320, %v319
  %v332 = vpack.c.bf16 %v322, %v321
  %v333 = vpack.c.bf16 %v324, %v323
  %v334 = vpack.c.bf16 %v326, %v325
  %v335 = vld [vmem:[%s3] sm:$0xf]
  %v336 = vld [vmem:[%s3 + $0x4] sm:$0xf]
  %v337 = vld [vmem:[%s3 + $0x8] sm:$0xf]
  %v338 = vld [vmem:[%s3 + $0xc] sm:$0xf]
  %v339 = vld [vmem:[%s3 + $0x10] sm:$0xf]
  %v340 = vld [vmem:[%s3 + $0x14] sm:$0xf]
  %v341 = vld [vmem:[%s3 + $0x18] sm:$0xf]
  %v342 = vld [vmem:[%s3 + $0x1c] sm:$0xf]
  %v343 = vld [vmem:[%s3 + $0x20] sm:$0xf]
  %v344 = vld [vmem:[%s3 + $0x24] sm:$0xf]
  %v345 = vld [vmem:[%s3 + $0x28] sm:$0xf]
  %v346 = vld [vmem:[%s3 + $0x2c] sm:$0xf]
  %v347 = vld [vmem:[%s3 + $0x30] sm:$0xf]
  %v348 = vld [vmem:[%s3 + $0x34] sm:$0xf]
  %v349 = vld [vmem:[%s3 + $0x38] sm:$0xf]
  %v350 = vld [vmem:[%s3 + $0x3c] sm:$0xf]
  %v351 = vld [vmem:[%s4] sm:$0x1]
  %v353 = vlaneseq
  %v354 = vshrl.u32 %v353, 7
  %v355 = vsub.s32 0, %v354
  %v356 = vrot.slane %v351, %v355
  %v374 = vunpack.c.l.b16 %v335
  %v375 = vunpack.c.l.b16 %v336
  %v376 = vunpack.c.l.b16 %v337
  %v377 = vunpack.c.l.b16 %v338
  %v378 = vunpack.c.l.b16 %v339
  %v379 = vunpack.c.l.b16 %v340
  %v380 = vunpack.c.l.b16 %v341
  %v381 = vunpack.c.l.b16 %v342
  %v382 = vunpack.c.l.b16 %v343
  %v383 = vunpack.c.l.b16 %v344
  %v384 = vunpack.c.l.b16 %v345
  %v385 = vunpack.c.l.b16 %v346
  %v386 = vunpack.c.l.b16 %v347
  %v387 = vunpack.c.l.b16 %v348
  %v388 = vunpack.c.l.b16 %v349
  %v389 = vunpack.c.l.b16 %v350
  %v390 = vpack.c.b16 %v375, %v374
  %v391 = vpack.c.b16 %v377, %v376
  %v392 = vpack.c.b16 %v379, %v378
  %v393 = vpack.c.b16 %v381, %v380
  %v394 = vpack.c.b16 %v383, %v382
  %v395 = vpack.c.b16 %v385, %v384
  %v396 = vpack.c.b16 %v387, %v386
  %v397 = vpack.c.b16 %v389, %v388
  %406 = vmatprep.subr.bf16.mxu0 0
  %407 = vmatpush1.bf16.msra.mxu0 %v390
  %408 = vmatprep.subr.bf16.mxu0 0
  %409 = vmatpush1.bf16.msra.mxu0 %v391
  %410 = vmatprep.subr.bf16.mxu0 0
  %411 = vmatpush1.bf16.msra.mxu0 %v392
  %412 = vmatprep.subr.bf16.mxu0 0
  %413 = vmatpush1.bf16.msra.mxu0 %v393
  %414 = vmatprep.subr.bf16.mxu0 0
  %415 = vmatpush1.bf16.msra.mxu0 %v394
  %416 = vmatprep.subr.bf16.mxu0 0
  %417 = vmatpush1.bf16.msra.mxu0 %v395
  %418 = vmatprep.subr.bf16.mxu0 0
  %419 = vmatpush1.bf16.msra.mxu0 %v396
  %420 = vmatprep.subr.bf16.mxu0 0
  %421 = vmatpush1.bf16.msra.mxu0 %v397
  %422 = vmatprep.subr.bf16.mxu0 0
  %423 = vmatpush1.bf16.msra.mxu0 0
  %424 = vmatprep.subr.bf16.mxu0 0
  %425 = vmatpush1.bf16.msra.mxu0 0
  %426 = vmatprep.subr.bf16.mxu0 0
  %427 = vmatpush1.bf16.msra.mxu0 0
  %428 = vmatprep.subr.bf16.mxu0 0
  %429 = vmatpush1.bf16.msra.mxu0 0
  %430 = vmatprep.subr.bf16.mxu0 0
  %431 = vmatpush1.bf16.msra.mxu0 0
  %432 = vmatprep.subr.bf16.mxu0 0
  %433 = vmatpush1.bf16.msra.mxu0 0
  %434 = vmatprep.subr.bf16.mxu0 0
  %435 = vmatpush1.bf16.msra.mxu0 0
  %436 = vmatprep.subr.bf16.mxu0 0
  %437 = vmatpush1.bf16.msra.mxu0 0
  %438 = vmatprep.mubr.bf16.mxu0 0
  %439 = vmatmul.mubr.bf16.gmra.mrb[0].mxu0 %v327
  %v440 = vpop.f32.mrb[0].mxu0
  %v441 = vadd.f32 %v356, %v440
  %v442 = vpop.f32.mrb[0].mxu0
  %v443 = vpop.f32.mrb[0].mxu0
  %v444 = vadd.f32 %v356, %v443
  %v445 = vpop.f32.mrb[0].mxu0
  %446 = vmatprep.mubr.bf16.mxu0 0
  %447 = vmatmul.mubr.bf16.gmra.mrb[0].mxu0 %v328
  %v448 = vpop.f32.mrb[0].mxu0
  %v449 = vadd.f32 %v356, %v448
  %v450 = vpop.f32.mrb[0].mxu0
  %v451 = vpop.f32.mrb[0].mxu0
  %v452 = vadd.f32 %v356, %v451
  %v453 = vpop.f32.mrb[0].mxu0
  %454 = vmatprep.mubr.bf16.mxu0 0
  %455 = vmatmul.mubr.bf16.gmra.mrb[0].mxu0 %v329
  %v456 = vpop.f32.mrb[0].mxu0
  %v457 = vadd.f32 %v356, %v456
  %v458 = vpop.f32.mrb[0].mxu0
  %v459 = vpop.f32.mrb[0].mxu0
  %v460 = vadd.f32 %v356, %v459
  %v461 = vpop.f32.mrb[0].mxu0
  %462 = vmatprep.mubr.bf16.mxu0 0
  %463 = vmatmul.mubr.bf16.gmra.mrb[0].mxu0 %v330
  %v464 = vpop.f32.mrb[0].mxu0
  %v465 = vadd.f32 %v356, %v464
  %v466 = vpop.f32.mrb[0].mxu0
  %v467 = vpop.f32.mrb[0].mxu0
  %v468 = vadd.f32 %v356, %v467
  %v469 = vpop.f32.mrb[0].mxu0
  %470 = vmatprep.mubr.bf16.mxu0 0
  %471 = vmatmul.mubr.bf16.gmra.mrb[0].mxu0 %v331
  %v472 = vpop.f32.mrb[0].mxu0
  %v473 = vadd.f32 %v356, %v472
  %v474 = vpop.f32.mrb[0].mxu0
  %v475 = vpop.f32.mrb[0].mxu0
  %v476 = vadd.f32 %v356, %v475
  %v477 = vpop.f32.mrb[0].mxu0
  %478 = vmatprep.mubr.bf16.mxu0 0
  %479 = vmatmul.mubr.bf16.gmra.mrb[0].mxu0 %v332
  %v480 = vpop.f32.mrb[0].mxu0
  %v481 = vadd.f32 %v356, %v480
  %v482 = vpop.f32.mrb[0].mxu0
  %v483 = vpop.f32.mrb[0].mxu0
  %v484 = vadd.f32 %v356, %v483
  %v485 = vpop.f32.mrb[0].mxu0
  %486 = vmatprep.mubr.bf16.mxu0 0
  %487 = vmatmul.mubr.bf16.gmra.mrb[0].mxu0 %v333
  %v488 = vpop.f32.mrb[0].mxu0
  %v489 = vadd.f32 %v356, %v488
  %v490 = vpop.f32.mrb[0].mxu0
  %v491 = vpop.f32.mrb[0].mxu0
  %v492 = vadd.f32 %v356, %v491
  %v493 = vpop.f32.mrb[0].mxu0
  %494 = vmatprep.mubr.bf16.mxu0 0
  %495 = vmatmul.mubr.bf16.gmra.mrb[0].mxu0 %v334
  %v496 = vpop.f32.mrb[0].mxu0
  %v497 = vadd.f32 %v356, %v496
  %v498 = vpop.f32.mrb[0].mxu0
  %v499 = vpop.f32.mrb[0].mxu0
  %v500 = vadd.f32 %v356, %v499
  %v501 = vpop.f32.mrb[0].mxu0
  %502 = vdwg.mxu0
  %503 = vmax.xlane.f32.xlu0 %v441
  %v504 = vpop.xlane.xlu0 %503
  %505 = vmax.xlane.f32.xlu0 %v444
  %v506 = vpop.xlane.xlu0 %505
  %507 = vmax.xlane.f32.xlu0 %v449
  %v508 = vpop.xlane.xlu0 %507
  %509 = vmax.xlane.f32.xlu0 %v452
  %v510 = vpop.xlane.xlu0 %509
  %511 = vmax.xlane.f32.xlu0 %v457
  %v512 = vpop.xlane.xlu0 %511
  %513 = vmax.xlane.f32.xlu0 %v460
  %v514 = vpop.xlane.xlu0 %513
  %515 = vmax.xlane.f32.xlu0 %v465
  %v516 = vpop.xlane.xlu0 %515
  %517 = vmax.xlane.f32.xlu0 %v468
  %v518 = vpop.xlane.xlu0 %517
  %519 = vmax.xlane.f32.xlu0 %v473
  %v520 = vpop.xlane.xlu0 %519
  %521 = vmax.xlane.f32.xlu0 %v476
  %v522 = vpop.xlane.xlu0 %521
  %523 = vmax.xlane.f32.xlu0 %v481
  %v524 = vpop.xlane.xlu0 %523
  %525 = vmax.xlane.f32.xlu0 %v484
  %v526 = vpop.xlane.xlu0 %525
  %527 = vmax.xlane.f32.xlu0 %v489
  %v528 = vpop.xlane.xlu0 %527
  %529 = vmax.xlane.f32.xlu0 %v492
  %v530 = vpop.xlane.xlu0 %529
  %531 = vmax.xlane.f32.xlu0 %v497
  %v532 = vpop.xlane.xlu0 %531
  %533 = vmax.xlane.f32.xlu0 %v500
  %v534 = vpop.xlane.xlu0 %533
  %v535 = vsub.f32 %v441, %v504
  %v536 = vsub.f32 %v444, %v506
  %v537 = vsub.f32 %v449, %v508
  %v538 = vsub.f32 %v452, %v510
  %v539 = vsub.f32 %v457, %v512
  %v540 = vsub.f32 %v460, %v514
  %v541 = vsub.f32 %v465, %v516
  %v542 = vsub.f32 %v468, %v518
  %v543 = vsub.f32 %v473, %v520
  %v544 = vsub.f32 %v476, %v522
  %v545 = vsub.f32 %v481, %v524
  %v546 = vsub.f32 %v484, %v526
  %v547 = vsub.f32 %v489, %v528
  %v548 = vsub.f32 %v492, %v530
  %v549 = vsub.f32 %v497, %v532
  %v550 = vsub.f32 %v500, %v534
  %v551 = vmul.f32 %v535, 1.442695
  %v552 = vpow.pop %v551
  %v553 = vmul.f32 %v536, 1.442695
  %v554 = vpow.pop %v553
  %v555 = vmul.f32 %v537, 1.442695
  %v556 = vpow.pop %v555
  %v557 = vmul.f32 %v538, 1.442695
  %v558 = vpow.pop %v557
  %v559 = vmul.f32 %v539, 1.442695
  %v560 = vpow.pop %v559
  %v561 = vmul.f32 %v540, 1.442695
  %v562 = vpow.pop %v561
  %v563 = vmul.f32 %v541, 1.442695
  %v564 = vpow.pop %v563
  %v565 = vmul.f32 %v542, 1.442695
  %v566 = vpow.pop %v565
  %v567 = vmul.f32 %v543, 1.442695
  %v568 = vpow.pop %v567
  %v569 = vmul.f32 %v544, 1.442695
  %v570 = vpow.pop %v569
  %v571 = vmul.f32 %v545, 1.442695
  %v572 = vpow.pop %v571
  %v573 = vmul.f32 %v546, 1.442695
  %v574 = vpow.pop %v573
  %v575 = vmul.f32 %v547, 1.442695
  %v576 = vpow.pop %v575
  %v577 = vmul.f32 %v548, 1.442695
  %v578 = vpow.pop %v577
  %v579 = vmul.f32 %v549, 1.442695
  %v580 = vpow.pop %v579
  %v581 = vmul.f32 %v550, 1.442695
  %v582 = vpow.pop %v581
  %583 = vadd.xlane.f32.xlu0 %v552
  %v584 = vpop.xlane.xlu0 %583
  %585 = vadd.xlane.f32.xlu0 %v554
  %v586 = vpop.xlane.xlu0 %585
  %587 = vadd.xlane.f32.xlu0 %v556
  %v588 = vpop.xlane.xlu0 %587
  %589 = vadd.xlane.f32.xlu0 %v558
  %v590 = vpop.xlane.xlu0 %589
  %591 = vadd.xlane.f32.xlu0 %v560
  %v592 = vpop.xlane.xlu0 %591
  %593 = vadd.xlane.f32.xlu0 %v562
  %v594 = vpop.xlane.xlu0 %593
  %595 = vadd.xlane.f32.xlu0 %v564
  %v596 = vpop.xlane.xlu0 %595
  %597 = vadd.xlane.f32.xlu0 %v566
  %v598 = vpop.xlane.xlu0 %597
  %599 = vadd.xlane.f32.xlu0 %v568
  %v600 = vpop.xlane.xlu0 %599
  %601 = vadd.xlane.f32.xlu0 %v570
  %v602 = vpop.xlane.xlu0 %601
  %603 = vadd.xlane.f32.xlu0 %v572
  %v604 = vpop.xlane.xlu0 %603
  %605 = vadd.xlane.f32.xlu0 %v574
  %v606 = vpop.xlane.xlu0 %605
  %607 = vadd.xlane.f32.xlu0 %v576
  %v608 = vpop.xlane.xlu0 %607
  %609 = vadd.xlane.f32.xlu0 %v578
  %v610 = vpop.xlane.xlu0 %609
  %611 = vadd.xlane.f32.xlu0 %v580
  %v612 = vpop.xlane.xlu0 %611
  %613 = vadd.xlane.f32.xlu0 %v582
  %v614 = vpop.xlane.xlu0 %613
  %v615 = vlog2.pop %v584
  %v616 = vmul.f32 %v615, 0.6931472
  %v617 = vlog2.pop %v586
  %v618 = vmul.f32 %v617, 0.6931472
  %v619 = vlog2.pop %v588
  %v620 = vmul.f32 %v619, 0.6931472
  %v621 = vlog2.pop %v590
  %v622 = vmul.f32 %v621, 0.6931472
  %v623 = vlog2.pop %v592
  %v624 = vmul.f32 %v623, 0.6931472
  %v625 = vlog2.pop %v594
  %v626 = vmul.f32 %v625, 0.6931472
  %v627 = vlog2.pop %v596
  %v628 = vmul.f32 %v627, 0.6931472
  %v629 = vlog2.pop %v598
  %v630 = vmul.f32 %v629, 0.6931472
  %v631 = vlog2.pop %v600
  %v632 = vmul.f32 %v631, 0.6931472
  %v633 = vlog2.pop %v602
  %v634 = vmul.f32 %v633, 0.6931472
  %v635 = vlog2.pop %v604
  %v636 = vmul.f32 %v635, 0.6931472
  %v637 = vlog2.pop %v606
  %v638 = vmul.f32 %v637, 0.6931472
  %v639 = vlog2.pop %v608
  %v640 = vmul.f32 %v639, 0.6931472
  %v641 = vlog2.pop %v610
  %v642 = vmul.f32 %v641, 0.6931472
  %v643 = vlog2.pop %v612
  %v644 = vmul.f32 %v643, 0.6931472
  %v645 = vlog2.pop %v614
  %v646 = vmul.f32 %v645, 0.6931472
  %v647 = vsub.f32 %v535, %v616
  %v648 = vsub.f32 %v536, %v618
  %v649 = vsub.f32 %v537, %v620
  %v650 = vsub.f32 %v538, %v622
  %v651 = vsub.f32 %v539, %v624
  %v652 = vsub.f32 %v540, %v626
  %v653 = vsub.f32 %v541, %v628
  %v654 = vsub.f32 %v542, %v630
  %v655 = vsub.f32 %v543, %v632
  %v656 = vsub.f32 %v544, %v634
  %v657 = vsub.f32 %v545, %v636
  %v658 = vsub.f32 %v546, %v638
  %v659 = vsub.f32 %v547, %v640
  %v660 = vsub.f32 %v548, %v642
  %v661 = vsub.f32 %v549, %v644
  %v662 = vsub.f32 %v550, %v646
  %663 = vst [vmem:[%s5] sm:$0xff] %v647
  %664 = vst [vmem:[%s5 + $0x8] sm:$0xff] %v648
  %665 = vst [vmem:[%s5 + $0x10] sm:$0xff] %v649
  %666 = vst [vmem:[%s5 + $0x18] sm:$0xff] %v650
  %667 = vst [vmem:[%s5 + $0x20] sm:$0xff] %v651
  %668 = vst [vmem:[%s5 + $0x28] sm:$0xff] %v652
  %669 = vst [vmem:[%s5 + $0x30] sm:$0xff] %v653
  %670 = vst [vmem:[%s5 + $0x38] sm:$0xff] %v654
  %671 = vst [vmem:[%s5 + $0x40] sm:$0xff] %v655
  %672 = vst [vmem:[%s5 + $0x48] sm:$0xff] %v656
  %673 = vst [vmem:[%s5 + $0x50] sm:$0xff] %v657
  %674 = vst [vmem:[%s5 + $0x58] sm:$0xff] %v658
  %675 = vst [vmem:[%s5 + $0x60] sm:$0xff] %v659
  %676 = vst [vmem:[%s5 + $0x68] sm:$0xff] %v660
  %677 = vst [vmem:[%s5 + $0x70] sm:$0xff] %v661
  %678 = vst [vmem:[%s5 + $0x78] sm:$0xff] %v662
  // Predicated region
  $region22: #{policy_network_forward.1} parent=0 // pred_check
    _
  $region23: #{policy_network_forward.1} parent=0 // pred_check_branch
    %680 = sbr.rel (0) target = $region25
  $region24: #{policy_network_forward.1} parent=0 // pred_region
    _
  $region25: #{policy_network_forward.1} parent=0 // pred_fallthru
    _
  // Predicated region
  $region26: #{policy_network_forward.1} parent=0 // pred_check
    _
  $region27: #{policy_network_forward.1} parent=0 // pred_check_branch
    %682 = sbr.rel (0) target = $region29
  $region28: #{policy_network_forward.1} parent=0 // pred_region
    _
  $region29: #{policy_network_forward.1} parent=0 // pred_fallthru
    _

</llo_original>
